<compile_context>
chip_gen: v5e
topology: v5e:2x2
jax: 0.10.0
libtpu: 0.0.40
codegen_flags: <defaults>
</compile_context>

<pallas_src>
import jax
import jax.numpy as jnp
import numpy as np
from jax.experimental import pallas as pl
from jax.experimental.pallas import tpu as pltpu


def unpool_kernel(x_ref, w_ref, b_ref, r_ref, sb_ref, o_ref):
    # x_ref : (1, Cin, H*W)          one image, NCHW flattened (spatial in lanes)
    # w_ref : (Cout, Cin)            1x1 conv weight
    # b_ref : (Cout, 1)              conv bias (broadcast along lanes)
    # r_ref : (H*W, H_out*W_out)     0/1 nearest-neighbour replication matrix
    # sb_ref: (1, Cout, H_out*W_out) scale_bias (VMEM-resident, loaded once)
    # o_ref : (1, Cout, H_out*W_out) output block (lane-dense: 1024 = 8*128)
    x = x_ref[0]                                                        # (Cin, HW)
    y = jnp.dot(w_ref[...], x, preferred_element_type=jnp.float32)      # (Cout, HW) 1x1 conv
    y = y + b_ref[...]                                                  # + conv bias
    y = jnp.where(y >= 0, y, 0.1 * y)                                   # LeakyReLU(0.1), pre-upsample (small)
    up = jnp.dot(y, r_ref[...], preferred_element_type=jnp.float32)     # (Cout, HWo) H & W nearest upsample
    o_ref[0] = (up + sb_ref[0]).astype(o_ref.dtype)                     # + scale_bias


def unpool_pallas(x_nchw, weight, bias, scale_bias, strides):
    """x_nchw: (B, Cin, H, W); weight: (Cout, Cin); bias: (Cout,);
    scale_bias: (1, Cout, H*sh, W*sw). Returns (B, Cout, H*sh, W*sw) (NCHW, like PyTorch)."""
    B, Cin, H, W = x_nchw.shape
    Cout = weight.shape[0]
    sh, sw = strides
    H_out, W_out = H * sh, W * sw
    HW, HWo = H * W, H_out * W_out

    # Free reshapes only (no transposes): spatial goes to the lane axis.
    x_flat = x_nchw.reshape(B, Cin, HW)
    sb_flat = scale_bias.reshape(1, Cout, HWo)
    bias2d = bias.reshape(Cout, 1)

    # Constant nearest-neighbour replication matrix:
    # R[h*W + w, ho*W_out + wo] = 1  iff  h == ho // sh and w == wo // sw.
    src = (jnp.arange(H_out)[:, None] // sh) * W + (jnp.arange(W_out)[None, :] // sw)
    rep = (jnp.arange(HW)[:, None] == src.reshape(-1)[None, :]).astype(jnp.float32)

    cost = pl.CostEstimate(
        flops=2 * B * Cout * HW * (Cin + HWo),
        transcendentals=0,
        bytes_accessed=4 * (B * Cin * HW + Cout * Cin + Cout + HW * HWo
                            + Cout * HWo + B * Cout * HWo),
    )

    out = pl.pallas_call(
        unpool_kernel,
        out_shape=jax.ShapeDtypeStruct((B, Cout, HWo), jnp.float32),
        grid_spec=pltpu.PrefetchScalarGridSpec(
            num_scalar_prefetch=0,
            grid=(B,),
            in_specs=[
                pl.BlockSpec((1, Cin, HW), lambda b: (b, 0, 0)),
                pl.BlockSpec((Cout, Cin), lambda b: (0, 0)),        # loaded once
                pl.BlockSpec((Cout, 1), lambda b: (0, 0)),          # loaded once
                pl.BlockSpec((HW, HWo), lambda b: (0, 0)),          # loaded once
                pl.BlockSpec((1, Cout, HWo), lambda b: (0, 0, 0)),  # loaded once
            ],
            out_specs=pl.BlockSpec((1, Cout, HWo), lambda b: (b, 0, 0)),
        ),
        compiler_params=pltpu.CompilerParams(
            dimension_semantics=("parallel",)),  # >=2 steps -> both TCs on v7x
        cost_estimate=cost,
    )(x_flat, weight, bias2d, rep, sb_flat)

    return out.reshape(B, Cout, H_out, W_out)


def unpool_reference(x_nchw, weight, bias, scale_bias, strides):
    sh, sw = strides
    y = jnp.einsum("oc,bchw->bohw", weight, x_nchw) + bias.reshape(1, -1, 1, 1)
    y = jnp.where(y >= 0, y, 0.1 * y)
    y = jnp.repeat(y, sh, axis=2)
    y = jnp.repeat(y, sw, axis=3)
    return y + scale_bias


if __name__ == "__main__":
    # Module config: Unpoolayer(in_filters=4, filters=8, strides=2)
    B, Cin, H, W = 2, 4, 16, 16
    Cout = 8
    strides = (2, 2)
    sh, sw = strides
    H_out, W_out = H * sh, W * sw

    key = jax.random.PRNGKey(0)
    k_x, k_w, k_b, k_sb = jax.random.split(key, 4)

    # Deterministic synthetic parameters (shapes from the module's __init__).
    # torch Conv2d weight is (Cout, Cin, 1, 1) -> stored squeezed as (Cout, Cin).
    x_nchw = jax.random.normal(k_x, (B, Cin, H, W), dtype=jnp.float32)   # PyTorch-style NCHW input
    weight = jax.random.normal(k_w, (Cout, Cin), dtype=jnp.float32) * 0.1
    bias = jax.random.normal(k_b, (Cout,), dtype=jnp.float32) * 0.1
    # torch scale_bias is zeros(1, C, H_out, W_out) on the first forward; use a small
    # deterministic nonzero value (as if trained) to exercise the add path.
    scale_bias = jax.random.normal(k_sb, (1, Cout, H_out, W_out), dtype=jnp.float32) * 0.01

    out = unpool_pallas(x_nchw, weight, bias, scale_bias, strides)
    out = jax.block_until_ready(out)

    ref = unpool_reference(x_nchw, weight, bias, scale_bias, strides)
    np.testing.assert_allclose(np.asarray(out), np.asarray(ref), rtol=1e-5, atol=1e-5)

    print("KERNEL_OK")
</pallas_src>

<mosaic_0001>
module attributes {stable_mosaic.version = 11 : i64} {
  func.func @unpool_kernel(%arg0: i32, %arg1: memref<1x4x256xf32, #tpu.memory_space<vmem>>, %arg2: memref<8x4xf32, #tpu.memory_space<vmem>>, %arg3: memref<8x1xf32, #tpu.memory_space<vmem>>, %arg4: memref<256x1024xf32, #tpu.memory_space<vmem>>, %arg5: memref<1x8x1024xf32, #tpu.memory_space<vmem>>, %arg6: memref<1x8x1024xf32, #tpu.memory_space<vmem>>) attributes {dimension_semantics = [#tpu.dimension_semantics<parallel>], iteration_bounds = array<i64: 2>, scalar_prefetch = 0 : i64, scratch_operands = 0 : i64, tpu.core_type = #tpu.core_type<tc>, window_params = [{transform_indices = @transform_0, window_bounds = array<i64: 1, 4, 256>}, {pipeline_mode = #tpu.pipeline_mode<synchronous>, transform_indices = @transform_1, window_bounds = array<i64: 8, 4>}, {pipeline_mode = #tpu.pipeline_mode<synchronous>, transform_indices = @transform_2, window_bounds = array<i64: 8, 1>}, {pipeline_mode = #tpu.pipeline_mode<synchronous>, transform_indices = @transform_3, window_bounds = array<i64: 256, 1024>}, {pipeline_mode = #tpu.pipeline_mode<synchronous>, transform_indices = @transform_4, window_bounds = array<i64: 1, 8, 1024>}, {transform_indices = @transform_5, window_bounds = array<i64: 1, 8, 1024>}]} {
    %c0 = arith.constant 0 : index
    %c0_0 = arith.constant 0 : index
    %c0_1 = arith.constant 0 : index
    %0 = vector.load %arg1[%c0, %c0_0, %c0_1] : memref<1x4x256xf32, #tpu.memory_space<vmem>>, vector<1x4x256xf32>
    %1 = vector.shape_cast %0 : vector<1x4x256xf32> to vector<4x256xf32>
    %c0_2 = arith.constant 0 : index
    %c0_3 = arith.constant 0 : index
    %2 = vector.load %arg2[%c0_2, %c0_3] : memref<8x4xf32, #tpu.memory_space<vmem>>, vector<8x4xf32>
    %cst = arith.constant dense<0.000000e+00> : vector<8x256xf32>
    %3 = tpu.matmul %2, %1, %cst {dimension_numbers = #tpu.dot_dimension_numbers<[1], [0], [0], [1], [0, 0, 1, 1], [], []>} : vector<8x4xf32>, vector<4x256xf32>, vector<8x256xf32> -> vector<8x256xf32>
    %c0_4 = arith.constant 0 : index
    %c0_5 = arith.constant 0 : index
    %4 = vector.load %arg3[%c0_4, %c0_5] : memref<8x1xf32, #tpu.memory_space<vmem>>, vector<8x1xf32>
    %5 = vector.broadcast %4 : vector<8x1xf32> to vector<8x256xf32>
    %6 = arith.addf %3, %5 : vector<8x256xf32>
    %cst_6 = arith.constant 0.000000e+00 : f32
    %7 = vector.broadcast %cst_6 : f32 to vector<8x256xf32>
    %8 = arith.cmpf oge, %6, %7 : vector<8x256xf32>
    %cst_7 = arith.constant 1.000000e-01 : f32
    %9 = vector.broadcast %cst_7 : f32 to vector<8x256xf32>
    %10 = arith.mulf %9, %6 : vector<8x256xf32>
    %11 = arith.select %8, %6, %10 : vector<8x256xi1>, vector<8x256xf32>
    %c0_8 = arith.constant 0 : index
    %c0_9 = arith.constant 0 : index
    %12 = vector.load %arg4[%c0_8, %c0_9] : memref<256x1024xf32, #tpu.memory_space<vmem>>, vector<256x1024xf32>
    %cst_10 = arith.constant dense<0.000000e+00> : vector<8x1024xf32>
    %13 = tpu.matmul %11, %12, %cst_10 {dimension_numbers = #tpu.dot_dimension_numbers<[1], [0], [0], [1], [0, 0, 1, 1], [], []>} : vector<8x256xf32>, vector<256x1024xf32>, vector<8x1024xf32> -> vector<8x1024xf32>
    %c0_11 = arith.constant 0 : index
    %c0_12 = arith.constant 0 : index
    %c0_13 = arith.constant 0 : index
    %14 = vector.load %arg5[%c0_11, %c0_12, %c0_13] : memref<1x8x1024xf32, #tpu.memory_space<vmem>>, vector<1x8x1024xf32>
    %15 = vector.shape_cast %14 : vector<1x8x1024xf32> to vector<8x1024xf32>
    %16 = arith.addf %13, %15 : vector<8x1024xf32>
    %c0_14 = arith.constant 0 : index
    %c0_15 = arith.constant 0 : index
    %c0_16 = arith.constant 0 : index
    %17 = vector.load %arg6[%c0_14, %c0_15, %c0_16] : memref<1x8x1024xf32, #tpu.memory_space<vmem>>, vector<1x8x1024xf32>
    %18 = vector.shape_cast %17 : vector<1x8x1024xf32> to vector<8x1024xf32>
    %19 = vector.shape_cast %16 : vector<8x1024xf32> to vector<1x8x1024xf32>
    tpu.vector_store %arg6[%c0_14, %c0_15, %c0_16], %19 {strides = array<i32>} : memref<1x8x1024xf32, #tpu.memory_space<vmem>>, vector<1x8x1024xf32>,
    return
  }
  func.func @transform_0(%arg0: i32) -> (i32, i32, i32) {
    %c0_i32 = arith.constant 0 : i32
    %c0_i32_0 = arith.constant 0 : i32
    %c0_i32_1 = arith.constant 0 : i32
    return %arg0, %c0_i32, %c0_i32_0 : i32, i32, i32
  }
  func.func @transform_1(%arg0: i32) -> (i32, i32) {
    %c0_i32 = arith.constant 0 : i32
    %c0_i32_0 = arith.constant 0 : i32
    %c0_i32_1 = arith.constant 0 : i32
    return %c0_i32, %c0_i32_0 : i32, i32
  }
  func.func @transform_2(%arg0: i32) -> (i32, i32) {
    %c0_i32 = arith.constant 0 : i32
    %c0_i32_0 = arith.constant 0 : i32
    %c0_i32_1 = arith.constant 0 : i32
    return %c0_i32, %c0_i32_0 : i32, i32
  }
  func.func @transform_3(%arg0: i32) -> (i32, i32) {
    %c0_i32 = arith.constant 0 : i32
    %c0_i32_0 = arith.constant 0 : i32
    %c0_i32_1 = arith.constant 0 : i32
    return %c0_i32, %c0_i32_0 : i32, i32
  }
  func.func @transform_4(%arg0: i32) -> (i32, i32, i32) {
    %c0_i32 = arith.constant 0 : i32
    %c0_i32_0 = arith.constant 0 : i32
    %c0_i32_1 = arith.constant 0 : i32
    %c0_i32_2 = arith.constant 0 : i32
    return %c0_i32, %c0_i32_0, %c0_i32_1 : i32, i32, i32
  }
  func.func @transform_5(%arg0: i32) -> (i32, i32, i32) {
    %c0_i32 = arith.constant 0 : i32
    %c0_i32_0 = arith.constant 0 : i32
    %c0_i32_1 = arith.constant 0 : i32
    return %arg0, %c0_i32, %c0_i32_0 : i32, i32, i32
  }
}

</mosaic_0001>

<llo_original>
// kernel: tpu_custom_call.1
$region0: #{tpu_custom_call.1}
  #allocation0 [shape = 'u32[]', space=smem, size = 0x4, offset = 0x4, fixed_abs, tag = 'smem constant byte address 0x4 - core index']
  #allocation1 [shape = 'u32[72,128]{1,0:T(1,128)}', space=vmem, size = 0x9000, scoped, tag = 'internal scratch']
  %s0 = inlined_call_operand.vmem [shape: f32[2,4,256], index: 0, kind: input, shape index: {}]
  %s1 = inlined_call_operand.vmem [shape: f32[8,4], index: 1, kind: input, shape index: {}]
  %s2 = inlined_call_operand.vmem [shape: f32[8,1], index: 2, kind: input, shape index: {}]
  %s3 = inlined_call_operand.hbm [shape: f32[256,1024], index: 3, kind: input, shape index: {}]
  %s4 = inlined_call_operand.hbm [shape: f32[1,8,1024], index: 4, kind: input, shape index: {}]
  %s5 = inlined_call_operand.hbm [shape: f32[2,8,1024], index: 5, kind: output, shape index: {}]
  %s6 = sld [smem:[#allocation0]]
  $region61: #{tpu_custom_call.1} parent=0
    _
  %s8 = ssub.s32 1, %s6
  %s9 = scalar_select 0, %s8, %s6
  $region1: #{tpu_custom_call.1} parent=0
    #allocation2 [shape = 'u8[1048576]{0}', space=vmem, size = 0x100000, scoped, tag = 'input window, operand 3, single buffered']
    #allocation3 [shape = 's32[2]{0}', space=sflag, size = 0x8, scoped, tag = 'scoped memory for tpu_custom_call.1']
    #allocation4 [shape = 's32[2]{0}', space=sflag, size = 0x8, scoped, tag = 'scoped memory for tpu_custom_call.1']
    #allocation5 [shape = 'u8[32768]{0}', space=vmem, size = 0x8000, scoped, tag = 'input window, operand 4, single buffered']
    #allocation6 [shape = 's32[1]{0}', space=sflag, size = 0x4, scoped, tag = 'scoped memory for tpu_custom_call.1']
    #allocation7 [shape = 'u8[65536]{0}', space=vmem, size = 0x10000, scoped, tag = 'output window, operand 0']
    %10 = vsyncpa [#allocation3], 0
    %11 = vsyncpa [#allocation6], 0
    %12 = vsyncpa [#allocation4], 0
    %s13 = scalar_lea.sflag [#allocation4], 1
    %14 = vsyncpa %s13, 0
    loop: start=0, step=1, limit=4
    $region2: #{tpu_custom_call.1} parent=1 // loop_pre_header
      _
    $region3: #{tpu_custom_call.1} parent=1 // loop_header
      %s16 = sphi 0, %s20
      %p17 = scmp.ge.s32.totalorder %s16, 4
      %s26 = sphi 0, %s28
      %s29 = sphi 0, %s26
      %s30 = sphi 0, %s29
      %s46 = sphi 0, %s30
      %s50 = sphi 0, %s50
      %s52 = sphi 0, %s50
      %s53 = sphi 0, %s52
      %s67 = sphi 0, %s53
      %s71 = sphi 0, %s71
      %s73 = sphi 0, %s71
      %s74 = sphi 0, %s73
      %s88 = sphi 0, %s74
      %s92 = sphi 0, %s92
      %s94 = sphi 0, %s92
      %s95 = sphi 0, %s94
      %s109 = sphi 0, %s95
      %s113 = sphi 0, %s113
      %s115 = sphi 0, %s113
      %s116 = sphi 0, %s115
      %s130 = sphi 0, %s116
      %s136 = sphi 0, %s138
      %s139 = sphi 0, %s136
      %s140 = sphi 0, %s139
      %s156 = sphi 0, %s140
    $region4: #{tpu_custom_call.1} parent=1 // loop_header_branch
      %19 = sbr.rel (%p17) target = $region8
    $region5: #{tpu_custom_call.1} parent=1 // loop_body
      %s21 = ssub.s32 %s16, 1
      %s22 = ssub.s32 %s16, 2
      %s23 = sadd.s32 %s16, 1
      %s24 = ssub.s32 %s16, %s23
      %p25 = scmp.eq.s32.totalorder %s24, 0
      %s27 = sadd.s32 %s26, 1
      %s28 = scalar_select %p25, %s26, %s27
      %p31 = pneg %p25
      %p32 = scmp.eq.s32.totalorder %s16, 1
      %p33 = por %p31, %p32
      %p34 = scmp.ne.s32.totalorder %s26, %s29
      %p35 = scmp.eq.s32.totalorder %s16, 0
      %p36 = por %p34, %p35
      %p37 = scmp.ne.s32.totalorder %s26, %s29
      %p38 = scmp.eq.s32.totalorder %s21, 1
      %p39 = por %p37, %p38
      %p40 = scmp.ne.s32.totalorder %s29, %s30
      %p41 = scmp.eq.s32.totalorder %s21, 0
      %p42 = por %p40, %p41
      %p43 = scmp.ne.s32.totalorder %s29, %s30
      %p44 = scmp.eq.s32.totalorder %s22, 1
      %p45 = por %p43, %p44
      %p47 = scmp.ne.s32.totalorder %s30, %s46
      %p48 = scmp.eq.s32.totalorder %s22, 0
      %p49 = por %p47, %p48
      %s51 = sadd.s32 %s50, 1
      %p54 = scmp.eq.s32.totalorder %s16, 1
      %p55 = scmp.ne.s32.totalorder %s50, %s52
      %p56 = scmp.eq.s32.totalorder %s16, 0
      %p57 = por %p55, %p56
      %p58 = scmp.ne.s32.totalorder %s50, %s52
      %p59 = scmp.eq.s32.totalorder %s21, 1
      %p60 = por %p58, %p59
      %p61 = scmp.ne.s32.totalorder %s52, %s53
      %p62 = scmp.eq.s32.totalorder %s21, 0
      %p63 = por %p61, %p62
      %p64 = scmp.ne.s32.totalorder %s52, %s53
      %p65 = scmp.eq.s32.totalorder %s22, 1
      %p66 = por %p64, %p65
      %p68 = scmp.ne.s32.totalorder %s53, %s67
      %p69 = scmp.eq.s32.totalorder %s22, 0
      %p70 = por %p68, %p69
      %s72 = sadd.s32 %s71, 1
      %p75 = scmp.eq.s32.totalorder %s16, 1
      %p76 = scmp.ne.s32.totalorder %s71, %s73
      %p77 = scmp.eq.s32.totalorder %s16, 0
      %p78 = por %p76, %p77
      %p79 = scmp.ne.s32.totalorder %s71, %s73
      %p80 = scmp.eq.s32.totalorder %s21, 1
      %p81 = por %p79, %p80
      %p82 = scmp.ne.s32.totalorder %s73, %s74
      %p83 = scmp.eq.s32.totalorder %s21, 0
      %p84 = por %p82, %p83
      %p85 = scmp.ne.s32.totalorder %s73, %s74
      %p86 = scmp.eq.s32.totalorder %s22, 1
      %p87 = por %p85, %p86
      %p89 = scmp.ne.s32.totalorder %s74, %s88
      %p90 = scmp.eq.s32.totalorder %s22, 0
      %p91 = por %p89, %p90
      %s93 = sadd.s32 %s92, 1
      %p96 = scmp.eq.s32.totalorder %s16, 1
      %p97 = scmp.ne.s32.totalorder %s92, %s94
      %p98 = scmp.eq.s32.totalorder %s16, 0
      %p99 = por %p97, %p98
      %p100 = scmp.ne.s32.totalorder %s92, %s94
      %p101 = scmp.eq.s32.totalorder %s21, 1
      %p102 = por %p100, %p101
      %p103 = scmp.ne.s32.totalorder %s94, %s95
      %p104 = scmp.eq.s32.totalorder %s21, 0
      %p105 = por %p103, %p104
      %p106 = scmp.ne.s32.totalorder %s94, %s95
      %p107 = scmp.eq.s32.totalorder %s22, 1
      %p108 = por %p106, %p107
      %p110 = scmp.ne.s32.totalorder %s95, %s109
      %p111 = scmp.eq.s32.totalorder %s22, 0
      %p112 = por %p110, %p111
      %s114 = sadd.s32 %s113, 1
      %p117 = scmp.eq.s32.totalorder %s16, 1
      %p118 = scmp.ne.s32.totalorder %s113, %s115
      %p119 = scmp.eq.s32.totalorder %s16, 0
      %p120 = por %p118, %p119
      %p121 = scmp.ne.s32.totalorder %s113, %s115
      %p122 = scmp.eq.s32.totalorder %s21, 1
      %p123 = por %p121, %p122
      %p124 = scmp.ne.s32.totalorder %s115, %s116
      %p125 = scmp.eq.s32.totalorder %s21, 0
      %p126 = por %p124, %p125
      %p127 = scmp.ne.s32.totalorder %s115, %s116
      %p128 = scmp.eq.s32.totalorder %s22, 1
      %p129 = por %p127, %p128
      %p131 = scmp.ne.s32.totalorder %s116, %s130
      %p132 = scmp.eq.s32.totalorder %s22, 0
      %p133 = por %p131, %p132
      %s134 = ssub.s32 %s16, %s23
      %p135 = scmp.eq.s32.totalorder %s134, 0
      %s137 = sadd.s32 %s136, 1
      %s138 = scalar_select %p135, %s136, %s137
      %p141 = pneg %p135
      %p142 = scmp.eq.s32.totalorder %s16, 1
      %p143 = por %p141, %p142
      %p144 = scmp.ne.s32.totalorder %s136, %s139
      %p145 = scmp.eq.s32.totalorder %s16, 0
      %p146 = por %p144, %p145
      %p147 = scmp.ne.s32.totalorder %s136, %s139
      %p148 = scmp.eq.s32.totalorder %s21, 1
      %p149 = por %p147, %p148
      %p150 = scmp.ne.s32.totalorder %s139, %s140
      %p151 = scmp.eq.s32.totalorder %s21, 0
      %p152 = por %p150, %p151
      %p153 = scmp.ne.s32.totalorder %s139, %s140
      %p154 = scmp.eq.s32.totalorder %s22, 1
      %p155 = por %p153, %p154
      %p157 = scmp.ne.s32.totalorder %s140, %s156
      %p158 = scmp.eq.s32.totalorder %s22, 0
      %p159 = por %p157, %p158
      %p160 = scmp.le.s32.totalorder 1, %s16
      %p161 = scmp.lt.s32.totalorder %s16, 3
      %p162 = pnand %p160, %p161
      %p163 = pneg %p162
      // Predicated region
      $region9: #{tpu_custom_call.1} parent=5 // pred_check
        _
      $region10: #{tpu_custom_call.1} parent=5 // pred_check_branch
        %165 = sbr.rel (%p162) target = $region12
      $region11: #{tpu_custom_call.1} parent=5 // pred_region
        %s166 = ssub.s32 %s16, 1
        // Predicated region
        $region13: #{tpu_custom_call.1} parent=11 // pred_check
          %p167 = pneg %p63
        $region14: #{tpu_custom_call.1} parent=11 // pred_check_branch
          %169 = sbr.rel (%p167) target = $region16
        $region15: #{tpu_custom_call.1} parent=11 // pred_region
          _
        $region16: #{tpu_custom_call.1} parent=11 // pred_fallthru
          _
        // Predicated region
        $region17: #{tpu_custom_call.1} parent=11 // pred_check
          %p170 = pneg %p84
        $region18: #{tpu_custom_call.1} parent=11 // pred_check_branch
          %172 = sbr.rel (%p170) target = $region20
        $region19: #{tpu_custom_call.1} parent=11 // pred_region
          _
        $region20: #{tpu_custom_call.1} parent=11 // pred_fallthru
          _
        // Predicated region
        $region21: #{tpu_custom_call.1} parent=11 // pred_check
          %p173 = pneg %p105
        $region22: #{tpu_custom_call.1} parent=11 // pred_check_branch
          %175 = sbr.rel (%p173) target = $region24
        $region23: #{tpu_custom_call.1} parent=11 // pred_region
          %177 = vsyncadd [#allocation3], 0
          %s178 = sshll.u32 %s3, 4
          %s179 = int_to_ptr.hbm [resolvable:$true] %s178
          %s180 = sshll.u32 [#allocation2], 4
          %s181 = int_to_ptr.vmem [resolvable:$true] %s180
          %186 = dma.hbm_to_vmem [thread:$0]  %s179, 32768, %s181, [#allocation3], 1024, 1024, 64
        $region24: #{tpu_custom_call.1} parent=11 // pred_fallthru
          _
        // Predicated region
        $region25: #{tpu_custom_call.1} parent=11 // pred_check
          %p187 = pneg %p126
        $region26: #{tpu_custom_call.1} parent=11 // pred_check_branch
          %189 = sbr.rel (%p187) target = $region28
        $region27: #{tpu_custom_call.1} parent=11 // pred_region
          %191 = vsyncadd [#allocation6], 0
          %s193 = sshll.u32 %s4, 4
          %s194 = int_to_ptr.hbm [resolvable:$true] %s193
          %s195 = sshll.u32 [#allocation5], 4
          %s196 = int_to_ptr.vmem [resolvable:$true] %s195
          %198 = dma.hbm_to_vmem [thread:$0]  %s194, 1024, %s196, [#allocation6]
        $region28: #{tpu_custom_call.1} parent=11 // pred_fallthru
          _
      $region12: #{tpu_custom_call.1} parent=5 // pred_fallthru
        _
      %p199 = scmp.lt.s32.totalorder %s16, 2
      // Predicated region
      $region29: #{tpu_custom_call.1} parent=5 // pred_check
        %p200 = pneg %p199
      $region30: #{tpu_custom_call.1} parent=5 // pred_check_branch
        %202 = sbr.rel (%p200) target = $region32
      $region31: #{tpu_custom_call.1} parent=5 // pred_region
        // Predicated region
        $region33: #{tpu_custom_call.1} parent=31 // pred_check
          %p203 = pneg %p36
        $region34: #{tpu_custom_call.1} parent=31 // pred_check_branch
          %205 = sbr.rel (%p203) target = $region36
        $region35: #{tpu_custom_call.1} parent=31 // pred_region
          %p206 = scmp.lt.s32.totalorder %s16, 1
          %s207 = scalar_select %p206, %s16, 1
          %s208 = smul.addr %s207, 2
          %s209 = smul.addr %s208, 4
          %s210 = scalar_lea.vmem %s0, %s209
        $region36: #{tpu_custom_call.1} parent=31 // pred_fallthru
          _
      $region32: #{tpu_custom_call.1} parent=5 // pred_fallthru
        _
      %p211 = scmp.le.s32.totalorder 1, %s16
      %p212 = scmp.lt.s32.totalorder %s16, 3
      %p213 = pnand %p211, %p212
      %p214 = pneg %p213
      // Predicated region
      $region37: #{tpu_custom_call.1} parent=5 // pred_check
        _
      $region38: #{tpu_custom_call.1} parent=5 // pred_check_branch
        %216 = sbr.rel (%p213) target = $region40
      $region39: #{tpu_custom_call.1} parent=5 // pred_region
        %s217 = ssub.s32 %s16, 1
        // Predicated region
        $region41: #{tpu_custom_call.1} parent=39 // pred_check
          %p218 = pneg %p105
        $region42: #{tpu_custom_call.1} parent=39 // pred_check_branch
          %220 = sbr.rel (%p218) target = $region44
        $region43: #{tpu_custom_call.1} parent=39 // pred_region
          %222 = dma.done [#allocation3], 32768
        $region44: #{tpu_custom_call.1} parent=39 // pred_fallthru
          _
        // Predicated region
        $region45: #{tpu_custom_call.1} parent=39 // pred_check
          %p223 = pneg %p126
        $region46: #{tpu_custom_call.1} parent=39 // pred_check_branch
          %225 = sbr.rel (%p223) target = $region48
        $region47: #{tpu_custom_call.1} parent=39 // pred_region
          %227 = dma.done [#allocation6], 1024
        $region48: #{tpu_custom_call.1} parent=39 // pred_fallthru
          _
        %p228 = scmp.lt.s32.totalorder %s21, 1
        %s229 = scalar_select %p228, %s21, 1
        %s230 = smul.addr %s229, 2
        %s231 = smul.addr %s230, 4
        %s232 = scalar_lea.vmem %s0, %s231
        %p233 = pneg %p42
        %p234 = pneg %p39
        %p235 = pneg %p63
        %p236 = pneg %p60
        %p237 = pneg %p84
        %p238 = pneg %p81
        %p239 = pneg %p105
        %p240 = pneg %p102
        %p241 = pneg %p126
        %p242 = pneg %p123
        %p243 = pneg %p152
        %p244 = pneg %p149
        %s245 = sand.u32 %s139, 1
        %s246 = scalar_lea.sflag [#allocation4], %s245
        %s247 = sand.u32 %s139, 1
        %s248 = smul.addr %s247, 64
        %s249 = scalar_lea.vmem [#allocation7], %s248
        %p250 = scmp.lt.s32.totalorder %s21, 1
        %s251 = scalar_select %p250, %s21, 1
        %s252 = smul.addr %s251, 2
        %s253 = smul.addr %s252, 4
        %s254 = scalar_lea.vmem %s0, %s253
        %v255 = vld [vmem:[%s254] sm:$0xff]
        %v256 = vld [vmem:[%s1] sm:$0xff]
        %v257 = vld [vmem:[%s2] sm:$0xff]
        %259 = vset.pattern.permute.xlu0 0
        %260 = vperm.xlu0 %259, %v257
        %v261 = vpop.permute.xlu0 %260
        %264 = vst [vmem:[#allocation1] ss:$2 sm:$0xff] %v255
        %v265 = vld.sshfl [vmem:[#allocation1] sm:$0xff pattern:$0x75316420]
        %v266 = vld.sshfl [vmem:[#allocation1 + $0x8] sm:$0xff pattern:$0x75316420]
        %vm267 = vcmask 31744
        %v269 = vsel %vm267, %v256, 0
        %vm271 = vcmask 1043456
        %v272 = vsel %vm271, %v265, 0
        %v274 = vsel %vm271, %v266, 0
        %276 = vmatpush.msra.mxu0 0.0
        %277 = vmatpush.msra.mxu0 0.0
        %278 = vmatpush.msra.mxu0 0.0
        %279 = vmatpush.msra.mxu0 0.0
        %280 = vmatpush.msra.mxu0 0.0
        %281 = vmatpush.msra.mxu0 0.0
        %282 = vmatpush.msra.mxu0 0.0
        %283 = vmatpush.msra.mxu0 0.0
        %284 = vmatpush.msra.mxu0 0.0
        %285 = vmatpush.msra.mxu0 0.0
        %286 = vmatpush.msra.mxu0 0.0
        %287 = vmatpush.msra.mxu0 0.0
        %288 = vmatpush.msra.mxu0 0.0
        %289 = vmatpush.msra.mxu0 0.0
        %290 = vmatpush.msra.mxu0 0.0
        %291 = vmatpush.msra.mxu0 %v272
        %292 = vmatmul.f32.gmra.mxu0 %v269
        %v293 = vpop.f32.mrf.mxu0
        %v294 = vadd.f32 %v261, %v293
        %295 = vdwg.mxu0
        %296 = vmatpush.msra.mxu0 0.0
        %297 = vmatpush.msra.mxu0 0.0
        %298 = vmatpush.msra.mxu0 0.0
        %299 = vmatpush.msra.mxu0 0.0
        %300 = vmatpush.msra.mxu0 0.0
        %301 = vmatpush.msra.mxu0 0.0
        %302 = vmatpush.msra.mxu0 0.0
        %303 = vmatpush.msra.mxu0 0.0
        %304 = vmatpush.msra.mxu0 0.0
        %305 = vmatpush.msra.mxu0 0.0
        %306 = vmatpush.msra.mxu0 0.0
        %307 = vmatpush.msra.mxu0 0.0
        %308 = vmatpush.msra.mxu0 0.0
        %309 = vmatpush.msra.mxu0 0.0
        %310 = vmatpush.msra.mxu0 0.0
        %311 = vmatpush.msra.mxu0 %v274
        %312 = vmatmul.f32.gmra.mxu0 %v269
        %v313 = vpop.f32.mrf.mxu0
        %v314 = vadd.f32 %v261, %v313
        %315 = vdwg.mxu0
        %vm316 = vcmp.ge.f32.partialorder %v294, 0.0
        %vm317 = vcmp.ge.f32.partialorder %v314, 0.0
        %v318 = vmul.f32 %v294, 0.1
        %v319 = vmul.f32 %v314, 0.1
        %v320 = vsel %vm316, %v294, %v318
        %v321 = vsel %vm317, %v314, %v319
        %v322 = vld [vmem:[#allocation2] sm:$0xff]
        %v323 = vld [vmem:[#allocation2 + $0x8] sm:$0xff]
        %v324 = vld [vmem:[#allocation2 + $0x10] sm:$0xff]
        %v325 = vld [vmem:[#allocation2 + $0x18] sm:$0xff]
        %v326 = vld [vmem:[#allocation2 + $0x20] sm:$0xff]
        %v327 = vld [vmem:[#allocation2 + $0x28] sm:$0xff]
        %v328 = vld [vmem:[#allocation2 + $0x30] sm:$0xff]
        %v329 = vld [vmem:[#allocation2 + $0x38] sm:$0xff]
        %v330 = vld [vmem:[#allocation2 + $0x40] sm:$0xff]
        %v331 = vld [vmem:[#allocation2 + $0x48] sm:$0xff]
        %v332 = vld [vmem:[#allocation2 + $0x50] sm:$0xff]
        %v333 = vld [vmem:[#allocation2 + $0x58] sm:$0xff]
        %v334 = vld [vmem:[#allocation2 + $0x60] sm:$0xff]
        %v335 = vld [vmem:[#allocation2 + $0x68] sm:$0xff]
        %v336 = vld [vmem:[#allocation2 + $0x70] sm:$0xff]
        %v337 = vld [vmem:[#allocation2 + $0x78] sm:$0xff]
        %v338 = vld [vmem:[#allocation2 + $0x80] sm:$0xff]
        %v339 = vld [vmem:[#allocation2 + $0x88] sm:$0xff]
        %v340 = vld [vmem:[#allocation2 + $0x90] sm:$0xff]
        %v341 = vld [vmem:[#allocation2 + $0x98] sm:$0xff]
        %v342 = vld [vmem:[#allocation2 + $0xa0] sm:$0xff]
        %v343 = vld [vmem:[#allocation2 + $0xa8] sm:$0xff]
        %v344 = vld [vmem:[#allocation2 + $0xb0] sm:$0xff]
        %v345 = vld [vmem:[#allocation2 + $0xb8] sm:$0xff]
        %v346 = vld [vmem:[#allocation2 + $0xc0] sm:$0xff]
        %v347 = vld [vmem:[#allocation2 + $0xc8] sm:$0xff]
        %v348 = vld [vmem:[#allocation2 + $0xd0] sm:$0xff]
        %v349 = vld [vmem:[#allocation2 + $0xd8] sm:$0xff]
        %v350 = vld [vmem:[#allocation2 + $0xe0] sm:$0xff]
        %v351 = vld [vmem:[#allocation2 + $0xe8] sm:$0xff]
        %v352 = vld [vmem:[#allocation2 + $0xf0] sm:$0xff]
        %v353 = vld [vmem:[#allocation2 + $0xf8] sm:$0xff]
        %v354 = vld [vmem:[#allocation2 + $0x100] sm:$0xff]
        %v355 = vld [vmem:[#allocation2 + $0x108] sm:$0xff]
        %v356 = vld [vmem:[#allocation2 + $0x110] sm:$0xff]
        %v357 = vld [vmem:[#allocation2 + $0x118] sm:$0xff]
        %v358 = vld [vmem:[#allocation2 + $0x120] sm:$0xff]
        %v359 = vld [vmem:[#allocation2 + $0x128] sm:$0xff]
        %v360 = vld [vmem:[#allocation2 + $0x130] sm:$0xff]
        %v361 = vld [vmem:[#allocation2 + $0x138] sm:$0xff]
        %v362 = vld [vmem:[#allocation2 + $0x140] sm:$0xff]
        %v363 = vld [vmem:[#allocation2 + $0x148] sm:$0xff]
        %v364 = vld [vmem:[#allocation2 + $0x150] sm:$0xff]
        %v365 = vld [vmem:[#allocation2 + $0x158] sm:$0xff]
        %v366 = vld [vmem:[#allocation2 + $0x160] sm:$0xff]
        %v367 = vld [vmem:[#allocation2 + $0x168] sm:$0xff]
        %v368 = vld [vmem:[#allocation2 + $0x170] sm:$0xff]
        %v369 = vld [vmem:[#allocation2 + $0x178] sm:$0xff]
        %v370 = vld [vmem:[#allocation2 + $0x180] sm:$0xff]
        %v371 = vld [vmem:[#allocation2 + $0x188] sm:$0xff]
        %v372 = vld [vmem:[#allocation2 + $0x190] sm:$0xff]
        %v373 = vld [vmem:[#allocation2 + $0x198] sm:$0xff]
        %v374 = vld [vmem:[#allocation2 + $0x1a0] sm:$0xff]
        %v375 = vld [vmem:[#allocation2 + $0x1a8] sm:$0xff]
        %v376 = vld [vmem:[#allocation2 + $0x1b0] sm:$0xff]
        %v377 = vld [vmem:[#allocation2 + $0x1b8] sm:$0xff]
        %v378 = vld [vmem:[#allocation2 + $0x1c0] sm:$0xff]
        %v379 = vld [vmem:[#allocation2 + $0x1c8] sm:$0xff]
        %v380 = vld [vmem:[#allocation2 + $0x1d0] sm:$0xff]
        %v381 = vld [vmem:[#allocation2 + $0x1d8] sm:$0xff]
        %v382 = vld [vmem:[#allocation2 + $0x1e0] sm:$0xff]
        %v383 = vld [vmem:[#allocation2 + $0x1e8] sm:$0xff]
        %v384 = vld [vmem:[#allocation2 + $0x1f0] sm:$0xff]
        %v385 = vld [vmem:[#allocation2 + $0x1f8] sm:$0xff]
        %v386 = vld [vmem:[#allocation2 + $0x200] sm:$0xff]
        %v387 = vld [vmem:[#allocation2 + $0x208] sm:$0xff]
        %v388 = vld [vmem:[#allocation2 + $0x210] sm:$0xff]
        %v389 = vld [vmem:[#allocation2 + $0x218] sm:$0xff]
        %v390 = vld [vmem:[#allocation2 + $0x220] sm:$0xff]
        %v391 = vld [vmem:[#allocation2 + $0x228] sm:$0xff]
        %v392 = vld [vmem:[#allocation2 + $0x230] sm:$0xff]
        %v393 = vld [vmem:[#allocation2 + $0x238] sm:$0xff]
        %v394 = vld [vmem:[#allocation2 + $0x240] sm:$0xff]
        %v395 = vld [vmem:[#allocation2 + $0x248] sm:$0xff]
        %v396 = vld [vmem:[#allocation2 + $0x250] sm:$0xff]
        %v397 = vld [vmem:[#allocation2 + $0x258] sm:$0xff]
        %v398 = vld [vmem:[#allocation2 + $0x260] sm:$0xff]
        %v399 = vld [vmem:[#allocation2 + $0x268] sm:$0xff]
        %v400 = vld [vmem:[#allocation2 + $0x270] sm:$0xff]
        %v401 = vld [vmem:[#allocation2 + $0x278] sm:$0xff]
        %v402 = vld [vmem:[#allocation2 + $0x280] sm:$0xff]
        %v403 = vld [vmem:[#allocation2 + $0x288] sm:$0xff]
        %v404 = vld [vmem:[#allocation2 + $0x290] sm:$0xff]
        %v405 = vld [vmem:[#allocation2 + $0x298] sm:$0xff]
        %v406 = vld [vmem:[#allocation2 + $0x2a0] sm:$0xff]
        %v407 = vld [vmem:[#allocation2 + $0x2a8] sm:$0xff]
        %v408 = vld [vmem:[#allocation2 + $0x2b0] sm:$0xff]
        %v409 = vld [vmem:[#allocation2 + $0x2b8] sm:$0xff]
        %v410 = vld [vmem:[#allocation2 + $0x2c0] sm:$0xff]
        %v411 = vld [vmem:[#allocation2 + $0x2c8] sm:$0xff]
        %v412 = vld [vmem:[#allocation2 + $0x2d0] sm:$0xff]
        %v413 = vld [vmem:[#allocation2 + $0x2d8] sm:$0xff]
        %v414 = vld [vmem:[#allocation2 + $0x2e0] sm:$0xff]
        %v415 = vld [vmem:[#allocation2 + $0x2e8] sm:$0xff]
        %v416 = vld [vmem:[#allocation2 + $0x2f0] sm:$0xff]
        %v417 = vld [vmem:[#allocation2 + $0x2f8] sm:$0xff]
        %v418 = vld [vmem:[#allocation2 + $0x300] sm:$0xff]
        %v419 = vld [vmem:[#allocation2 + $0x308] sm:$0xff]
        %v420 = vld [vmem:[#allocation2 + $0x310] sm:$0xff]
        %v421 = vld [vmem:[#allocation2 + $0x318] sm:$0xff]
        %v422 = vld [vmem:[#allocation2 + $0x320] sm:$0xff]
        %v423 = vld [vmem:[#allocation2 + $0x328] sm:$0xff]
        %v424 = vld [vmem:[#allocation2 + $0x330] sm:$0xff]
        %v425 = vld [vmem:[#allocation2 + $0x338] sm:$0xff]
        %v426 = vld [vmem:[#allocation2 + $0x340] sm:$0xff]
        %v427 = vld [vmem:[#allocation2 + $0x348] sm:$0xff]
        %v428 = vld [vmem:[#allocation2 + $0x350] sm:$0xff]
        %v429 = vld [vmem:[#allocation2 + $0x358] sm:$0xff]
        %v430 = vld [vmem:[#allocation2 + $0x360] sm:$0xff]
        %v431 = vld [vmem:[#allocation2 + $0x368] sm:$0xff]
        %v432 = vld [vmem:[#allocation2 + $0x370] sm:$0xff]
        %v433 = vld [vmem:[#allocation2 + $0x378] sm:$0xff]
        %v434 = vld [vmem:[#allocation2 + $0x380] sm:$0xff]
        %v435 = vld [vmem:[#allocation2 + $0x388] sm:$0xff]
        %v436 = vld [vmem:[#allocation2 + $0x390] sm:$0xff]
        %v437 = vld [vmem:[#allocation2 + $0x398] sm:$0xff]
        %v438 = vld [vmem:[#allocation2 + $0x3a0] sm:$0xff]
        %v439 = vld [vmem:[#allocation2 + $0x3a8] sm:$0xff]
        %v440 = vld [vmem:[#allocation2 + $0x3b0] sm:$0xff]
        %v441 = vld [vmem:[#allocation2 + $0x3b8] sm:$0xff]
        %v442 = vld [vmem:[#allocation2 + $0x3c0] sm:$0xff]
        %v443 = vld [vmem:[#allocation2 + $0x3c8] sm:$0xff]
        %v444 = vld [vmem:[#allocation2 + $0x3d0] sm:$0xff]
        %v445 = vld [vmem:[#allocation2 + $0x3d8] sm:$0xff]
        %v446 = vld [vmem:[#allocation2 + $0x3e0] sm:$0xff]
        %v447 = vld [vmem:[#allocation2 + $0x3e8] sm:$0xff]
        %v448 = vld [vmem:[#allocation2 + $0x3f0] sm:$0xff]
        %v449 = vld [vmem:[#allocation2 + $0x3f8] sm:$0xff]
        %v450 = vld [vmem:[#allocation2 + $0x400] sm:$0xff]
        %v451 = vld [vmem:[#allocation2 + $0x408] sm:$0xff]
        %v452 = vld [vmem:[#allocation2 + $0x410] sm:$0xff]
        %v453 = vld [vmem:[#allocation2 + $0x418] sm:$0xff]
        %v454 = vld [vmem:[#allocation2 + $0x420] sm:$0xff]
        %v455 = vld [vmem:[#allocation2 + $0x428] sm:$0xff]
        %v456 = vld [vmem:[#allocation2 + $0x430] sm:$0xff]
        %v457 = vld [vmem:[#allocation2 + $0x438] sm:$0xff]
        %v458 = vld [vmem:[#allocation2 + $0x440] sm:$0xff]
        %v459 = vld [vmem:[#allocation2 + $0x448] sm:$0xff]
        %v460 = vld [vmem:[#allocation2 + $0x450] sm:$0xff]
        %v461 = vld [vmem:[#allocation2 + $0x458] sm:$0xff]
        %v462 = vld [vmem:[#allocation2 + $0x460] sm:$0xff]
        %v463 = vld [vmem:[#allocation2 + $0x468] sm:$0xff]
        %v464 = vld [vmem:[#allocation2 + $0x470] sm:$0xff]
        %v465 = vld [vmem:[#allocation2 + $0x478] sm:$0xff]
        %v466 = vld [vmem:[#allocation2 + $0x480] sm:$0xff]
        %v467 = vld [vmem:[#allocation2 + $0x488] sm:$0xff]
        %v468 = vld [vmem:[#allocation2 + $0x490] sm:$0xff]
        %v469 = vld [vmem:[#allocation2 + $0x498] sm:$0xff]
        %v470 = vld [vmem:[#allocation2 + $0x4a0] sm:$0xff]
        %v471 = vld [vmem:[#allocation2 + $0x4a8] sm:$0xff]
        %v472 = vld [vmem:[#allocation2 + $0x4b0] sm:$0xff]
        %v473 = vld [vmem:[#allocation2 + $0x4b8] sm:$0xff]
        %v474 = vld [vmem:[#allocation2 + $0x4c0] sm:$0xff]
        %v475 = vld [vmem:[#allocation2 + $0x4c8] sm:$0xff]
        %v476 = vld [vmem:[#allocation2 + $0x4d0] sm:$0xff]
        %v477 = vld [vmem:[#allocation2 + $0x4d8] sm:$0xff]
        %v478 = vld [vmem:[#allocation2 + $0x4e0] sm:$0xff]
        %v479 = vld [vmem:[#allocation2 + $0x4e8] sm:$0xff]
        %v480 = vld [vmem:[#allocation2 + $0x4f0] sm:$0xff]
        %v481 = vld [vmem:[#allocation2 + $0x4f8] sm:$0xff]
        %v482 = vld [vmem:[#allocation2 + $0x500] sm:$0xff]
        %v483 = vld [vmem:[#allocation2 + $0x508] sm:$0xff]
        %v484 = vld [vmem:[#allocation2 + $0x510] sm:$0xff]
        %v485 = vld [vmem:[#allocation2 + $0x518] sm:$0xff]
        %v486 = vld [vmem:[#allocation2 + $0x520] sm:$0xff]
        %v487 = vld [vmem:[#allocation2 + $0x528] sm:$0xff]
        %v488 = vld [vmem:[#allocation2 + $0x530] sm:$0xff]
        %v489 = vld [vmem:[#allocation2 + $0x538] sm:$0xff]
        %v490 = vld [vmem:[#allocation2 + $0x540] sm:$0xff]
        %v491 = vld [vmem:[#allocation2 + $0x548] sm:$0xff]
        %v492 = vld [vmem:[#allocation2 + $0x550] sm:$0xff]
        %v493 = vld [vmem:[#allocation2 + $0x558] sm:$0xff]
        %v494 = vld [vmem:[#allocation2 + $0x560] sm:$0xff]
        %v495 = vld [vmem:[#allocation2 + $0x568] sm:$0xff]
        %v496 = vld [vmem:[#allocation2 + $0x570] sm:$0xff]
        %v497 = vld [vmem:[#allocation2 + $0x578] sm:$0xff]
        %v498 = vld [vmem:[#allocation2 + $0x580] sm:$0xff]
        %v499 = vld [vmem:[#allocation2 + $0x588] sm:$0xff]
        %v500 = vld [vmem:[#allocation2 + $0x590] sm:$0xff]
        %v501 = vld [vmem:[#allocation2 + $0x598] sm:$0xff]
        %v502 = vld [vmem:[#allocation2 + $0x5a0] sm:$0xff]
        %v503 = vld [vmem:[#allocation2 + $0x5a8] sm:$0xff]
        %v504 = vld [vmem:[#allocation2 + $0x5b0] sm:$0xff]
        %v505 = vld [vmem:[#allocation2 + $0x5b8] sm:$0xff]
        %v506 = vld [vmem:[#allocation2 + $0x5c0] sm:$0xff]
        %v507 = vld [vmem:[#allocation2 + $0x5c8] sm:$0xff]
        %v508 = vld [vmem:[#allocation2 + $0x5d0] sm:$0xff]
        %v509 = vld [vmem:[#allocation2 + $0x5d8] sm:$0xff]
        %v510 = vld [vmem:[#allocation2 + $0x5e0] sm:$0xff]
        %v511 = vld [vmem:[#allocation2 + $0x5e8] sm:$0xff]
        %v512 = vld [vmem:[#allocation2 + $0x5f0] sm:$0xff]
        %v513 = vld [vmem:[#allocation2 + $0x5f8] sm:$0xff]
        %v514 = vld [vmem:[#allocation2 + $0x600] sm:$0xff]
        %v515 = vld [vmem:[#allocation2 + $0x608] sm:$0xff]
        %v516 = vld [vmem:[#allocation2 + $0x610] sm:$0xff]
        %v517 = vld [vmem:[#allocation2 + $0x618] sm:$0xff]
        %v518 = vld [vmem:[#allocation2 + $0x620] sm:$0xff]
        %v519 = vld [vmem:[#allocation2 + $0x628] sm:$0xff]
        %v520 = vld [vmem:[#allocation2 + $0x630] sm:$0xff]
        %v521 = vld [vmem:[#allocation2 + $0x638] sm:$0xff]
        %v522 = vld [vmem:[#allocation2 + $0x640] sm:$0xff]
        %v523 = vld [vmem:[#allocation2 + $0x648] sm:$0xff]
        %v524 = vld [vmem:[#allocation2 + $0x650] sm:$0xff]
        %v525 = vld [vmem:[#allocation2 + $0x658] sm:$0xff]
        %v526 = vld [vmem:[#allocation2 + $0x660] sm:$0xff]
        %v527 = vld [vmem:[#allocation2 + $0x668] sm:$0xff]
        %v528 = vld [vmem:[#allocation2 + $0x670] sm:$0xff]
        %v529 = vld [vmem:[#allocation2 + $0x678] sm:$0xff]
        %v530 = vld [vmem:[#allocation2 + $0x680] sm:$0xff]
        %v531 = vld [vmem:[#allocation2 + $0x688] sm:$0xff]
        %v532 = vld [vmem:[#allocation2 + $0x690] sm:$0xff]
        %v533 = vld [vmem:[#allocation2 + $0x698] sm:$0xff]
        %v534 = vld [vmem:[#allocation2 + $0x6a0] sm:$0xff]
        %v535 = vld [vmem:[#allocation2 + $0x6a8] sm:$0xff]
        %v536 = vld [vmem:[#allocation2 + $0x6b0] sm:$0xff]
        %v537 = vld [vmem:[#allocation2 + $0x6b8] sm:$0xff]
        %v538 = vld [vmem:[#allocation2 + $0x6c0] sm:$0xff]
        %v539 = vld [vmem:[#allocation2 + $0x6c8] sm:$0xff]
        %v540 = vld [vmem:[#allocation2 + $0x6d0] sm:$0xff]
        %v541 = vld [vmem:[#allocation2 + $0x6d8] sm:$0xff]
        %v542 = vld [vmem:[#allocation2 + $0x6e0] sm:$0xff]
        %v543 = vld [vmem:[#allocation2 + $0x6e8] sm:$0xff]
        %v544 = vld [vmem:[#allocation2 + $0x6f0] sm:$0xff]
        %v545 = vld [vmem:[#allocation2 + $0x6f8] sm:$0xff]
        %v546 = vld [vmem:[#allocation2 + $0x700] sm:$0xff]
        %v547 = vld [vmem:[#allocation2 + $0x708] sm:$0xff]
        %v548 = vld [vmem:[#allocation2 + $0x710] sm:$0xff]
        %v549 = vld [vmem:[#allocation2 + $0x718] sm:$0xff]
        %v550 = vld [vmem:[#allocation2 + $0x720] sm:$0xff]
        %v551 = vld [vmem:[#allocation2 + $0x728] sm:$0xff]
        %v552 = vld [vmem:[#allocation2 + $0x730] sm:$0xff]
        %v553 = vld [vmem:[#allocation2 + $0x738] sm:$0xff]
        %v554 = vld [vmem:[#allocation2 + $0x740] sm:$0xff]
        %v555 = vld [vmem:[#allocation2 + $0x748] sm:$0xff]
        %v556 = vld [vmem:[#allocation2 + $0x750] sm:$0xff]
        %v557 = vld [vmem:[#allocation2 + $0x758] sm:$0xff]
        %v558 = vld [vmem:[#allocation2 + $0x760] sm:$0xff]
        %v559 = vld [vmem:[#allocation2 + $0x768] sm:$0xff]
        %v560 = vld [vmem:[#allocation2 + $0x770] sm:$0xff]
        %v561 = vld [vmem:[#allocation2 + $0x778] sm:$0xff]
        %v562 = vld [vmem:[#allocation2 + $0x780] sm:$0xff]
        %v563 = vld [vmem:[#allocation2 + $0x788] sm:$0xff]
        %v564 = vld [vmem:[#allocation2 + $0x790] sm:$0xff]
        %v565 = vld [vmem:[#allocation2 + $0x798] sm:$0xff]
        %v566 = vld [vmem:[#allocation2 + $0x7a0] sm:$0xff]
        %v567 = vld [vmem:[#allocation2 + $0x7a8] sm:$0xff]
        %v568 = vld [vmem:[#allocation2 + $0x7b0] sm:$0xff]
        %v569 = vld [vmem:[#allocation2 + $0x7b8] sm:$0xff]
        %v570 = vld [vmem:[#allocation2 + $0x7c0] sm:$0xff]
        %v571 = vld [vmem:[#allocation2 + $0x7c8] sm:$0xff]
        %v572 = vld [vmem:[#allocation2 + $0x7d0] sm:$0xff]
        %v573 = vld [vmem:[#allocation2 + $0x7d8] sm:$0xff]
        %v574 = vld [vmem:[#allocation2 + $0x7e0] sm:$0xff]
        %v575 = vld [vmem:[#allocation2 + $0x7e8] sm:$0xff]
        %v576 = vld [vmem:[#allocation2 + $0x7f0] sm:$0xff]
        %v577 = vld [vmem:[#allocation2 + $0x7f8] sm:$0xff]
        %v578 = vld [vmem:[#allocation5] sm:$0xff]
        %v579 = vld [vmem:[#allocation5 + $0x8] sm:$0xff]
        %v580 = vld [vmem:[#allocation5 + $0x10] sm:$0xff]
        %v581 = vld [vmem:[#allocation5 + $0x18] sm:$0xff]
        %v582 = vld [vmem:[#allocation5 + $0x20] sm:$0xff]
        %v583 = vld [vmem:[#allocation5 + $0x28] sm:$0xff]
        %v584 = vld [vmem:[#allocation5 + $0x30] sm:$0xff]
        %v585 = vld [vmem:[#allocation5 + $0x38] sm:$0xff]
        %586 = vmatpush.msra.mxu0 %v442
        %587 = vmatpush.msra.mxu0 %v434
        %588 = vmatpush.msra.mxu0 %v426
        %589 = vmatpush.msra.mxu0 %v418
        %590 = vmatpush.msra.mxu0 %v410
        %591 = vmatpush.msra.mxu0 %v402
        %592 = vmatpush.msra.mxu0 %v394
        %593 = vmatpush.msra.mxu0 %v386
        %594 = vmatpush.msra.mxu0 %v378
        %595 = vmatpush.msra.mxu0 %v370
        %596 = vmatpush.msra.mxu0 %v362
        %597 = vmatpush.msra.mxu0 %v354
        %598 = vmatpush.msra.mxu0 %v346
        %599 = vmatpush.msra.mxu0 %v338
        %600 = vmatpush.msra.mxu0 %v330
        %601 = vmatpush.msra.mxu0 %v322
        %602 = vmatmul.f32.gmra.mxu0 %v320
        %v603 = vpop.f32.mrf.mxu0
        %v604 = vadd.f32 %v578, %v603
        %605 = vdwg.mxu0
        %606 = vmatpush.msra.mxu0 %v570
        %607 = vmatpush.msra.mxu0 %v562
        %608 = vmatpush.msra.mxu0 %v554
        %609 = vmatpush.msra.mxu0 %v546
        %610 = vmatpush.msra.mxu0 %v538
        %611 = vmatpush.msra.mxu0 %v530
        %612 = vmatpush.msra.mxu0 %v522
        %613 = vmatpush.msra.mxu0 %v514
        %614 = vmatpush.msra.mxu0 %v506
        %615 = vmatpush.msra.mxu0 %v498
        %616 = vmatpush.msra.mxu0 %v490
        %617 = vmatpush.msra.mxu0 %v482
        %618 = vmatpush.msra.mxu0 %v474
        %619 = vmatpush.msra.mxu0 %v466
        %620 = vmatpush.msra.mxu0 %v458
        %621 = vmatpush.msra.mxu0 %v450
        %622 = vmatmul.f32.gmra.mxu0 %v321
        %v623 = vpop.f32.mrf.mxu0
        %v624 = vadd.f32 %v604, %v623
        %625 = vdwg.mxu0
        %626 = vmatpush.msra.mxu0 %v443
        %627 = vmatpush.msra.mxu0 %v435
        %628 = vmatpush.msra.mxu0 %v427
        %629 = vmatpush.msra.mxu0 %v419
        %630 = vmatpush.msra.mxu0 %v411
        %631 = vmatpush.msra.mxu0 %v403
        %632 = vmatpush.msra.mxu0 %v395
        %633 = vmatpush.msra.mxu0 %v387
        %634 = vmatpush.msra.mxu0 %v379
        %635 = vmatpush.msra.mxu0 %v371
        %636 = vmatpush.msra.mxu0 %v363
        %637 = vmatpush.msra.mxu0 %v355
        %638 = vmatpush.msra.mxu0 %v347
        %639 = vmatpush.msra.mxu0 %v339
        %640 = vmatpush.msra.mxu0 %v331
        %641 = vmatpush.msra.mxu0 %v323
        %642 = vmatmul.f32.gmra.mxu0 %v320
        %v643 = vpop.f32.mrf.mxu0
        %v644 = vadd.f32 %v579, %v643
        %645 = vdwg.mxu0
        %646 = vmatpush.msra.mxu0 %v571
        %647 = vmatpush.msra.mxu0 %v563
        %648 = vmatpush.msra.mxu0 %v555
        %649 = vmatpush.msra.mxu0 %v547
        %650 = vmatpush.msra.mxu0 %v539
        %651 = vmatpush.msra.mxu0 %v531
        %652 = vmatpush.msra.mxu0 %v523
        %653 = vmatpush.msra.mxu0 %v515
        %654 = vmatpush.msra.mxu0 %v507
        %655 = vmatpush.msra.mxu0 %v499
        %656 = vmatpush.msra.mxu0 %v491
        %657 = vmatpush.msra.mxu0 %v483
        %658 = vmatpush.msra.mxu0 %v475
        %659 = vmatpush.msra.mxu0 %v467
        %660 = vmatpush.msra.mxu0 %v459
        %661 = vmatpush.msra.mxu0 %v451
        %662 = vmatmul.f32.gmra.mxu0 %v321
        %v663 = vpop.f32.mrf.mxu0
        %v664 = vadd.f32 %v644, %v663
        %665 = vdwg.mxu0
        %666 = vmatpush.msra.mxu0 %v444
        %667 = vmatpush.msra.mxu0 %v436
        %668 = vmatpush.msra.mxu0 %v428
        %669 = vmatpush.msra.mxu0 %v420
        %670 = vmatpush.msra.mxu0 %v412
        %671 = vmatpush.msra.mxu0 %v404
        %672 = vmatpush.msra.mxu0 %v396
        %673 = vmatpush.msra.mxu0 %v388
        %674 = vmatpush.msra.mxu0 %v380
        %675 = vmatpush.msra.mxu0 %v372
        %676 = vmatpush.msra.mxu0 %v364
        %677 = vmatpush.msra.mxu0 %v356
        %678 = vmatpush.msra.mxu0 %v348
        %679 = vmatpush.msra.mxu0 %v340
        %680 = vmatpush.msra.mxu0 %v332
        %681 = vmatpush.msra.mxu0 %v324
        %682 = vmatmul.f32.gmra.mxu0 %v320
        %v683 = vpop.f32.mrf.mxu0
        %v684 = vadd.f32 %v580, %v683
        %685 = vdwg.mxu0
        %686 = vmatpush.msra.mxu0 %v572
        %687 = vmatpush.msra.mxu0 %v564
        %688 = vmatpush.msra.mxu0 %v556
        %689 = vmatpush.msra.mxu0 %v548
        %690 = vmatpush.msra.mxu0 %v540
        %691 = vmatpush.msra.mxu0 %v532
        %692 = vmatpush.msra.mxu0 %v524
        %693 = vmatpush.msra.mxu0 %v516
        %694 = vmatpush.msra.mxu0 %v508
        %695 = vmatpush.msra.mxu0 %v500
        %696 = vmatpush.msra.mxu0 %v492
        %697 = vmatpush.msra.mxu0 %v484
        %698 = vmatpush.msra.mxu0 %v476
        %699 = vmatpush.msra.mxu0 %v468
        %700 = vmatpush.msra.mxu0 %v460
        %701 = vmatpush.msra.mxu0 %v452
        %702 = vmatmul.f32.gmra.mxu0 %v321
        %v703 = vpop.f32.mrf.mxu0
        %v704 = vadd.f32 %v684, %v703
        %705 = vdwg.mxu0
        %706 = vmatpush.msra.mxu0 %v445
        %707 = vmatpush.msra.mxu0 %v437
        %708 = vmatpush.msra.mxu0 %v429
        %709 = vmatpush.msra.mxu0 %v421
        %710 = vmatpush.msra.mxu0 %v413
        %711 = vmatpush.msra.mxu0 %v405
        %712 = vmatpush.msra.mxu0 %v397
        %713 = vmatpush.msra.mxu0 %v389
        %714 = vmatpush.msra.mxu0 %v381
        %715 = vmatpush.msra.mxu0 %v373
        %716 = vmatpush.msra.mxu0 %v365
        %717 = vmatpush.msra.mxu0 %v357
        %718 = vmatpush.msra.mxu0 %v349
        %719 = vmatpush.msra.mxu0 %v341
        %720 = vmatpush.msra.mxu0 %v333
        %721 = vmatpush.msra.mxu0 %v325
        %722 = vmatmul.f32.gmra.mxu0 %v320
        %v723 = vpop.f32.mrf.mxu0
        %v724 = vadd.f32 %v581, %v723
        %725 = vdwg.mxu0
        %726 = vmatpush.msra.mxu0 %v573
        %727 = vmatpush.msra.mxu0 %v565
        %728 = vmatpush.msra.mxu0 %v557
        %729 = vmatpush.msra.mxu0 %v549
        %730 = vmatpush.msra.mxu0 %v541
        %731 = vmatpush.msra.mxu0 %v533
        %732 = vmatpush.msra.mxu0 %v525
        %733 = vmatpush.msra.mxu0 %v517
        %734 = vmatpush.msra.mxu0 %v509
        %735 = vmatpush.msra.mxu0 %v501
        %736 = vmatpush.msra.mxu0 %v493
        %737 = vmatpush.msra.mxu0 %v485
        %738 = vmatpush.msra.mxu0 %v477
        %739 = vmatpush.msra.mxu0 %v469
        %740 = vmatpush.msra.mxu0 %v461
        %741 = vmatpush.msra.mxu0 %v453
        %742 = vmatmul.f32.gmra.mxu0 %v321
        %v743 = vpop.f32.mrf.mxu0
        %v744 = vadd.f32 %v724, %v743
        %745 = vdwg.mxu0
        %746 = vmatpush.msra.mxu0 %v446
        %747 = vmatpush.msra.mxu0 %v438
        %748 = vmatpush.msra.mxu0 %v430
        %749 = vmatpush.msra.mxu0 %v422
        %750 = vmatpush.msra.mxu0 %v414
        %751 = vmatpush.msra.mxu0 %v406
        %752 = vmatpush.msra.mxu0 %v398
        %753 = vmatpush.msra.mxu0 %v390
        %754 = vmatpush.msra.mxu0 %v382
        %755 = vmatpush.msra.mxu0 %v374
        %756 = vmatpush.msra.mxu0 %v366
        %757 = vmatpush.msra.mxu0 %v358
        %758 = vmatpush.msra.mxu0 %v350
        %759 = vmatpush.msra.mxu0 %v342
        %760 = vmatpush.msra.mxu0 %v334
        %761 = vmatpush.msra.mxu0 %v326
        %762 = vmatmul.f32.gmra.mxu0 %v320
        %v763 = vpop.f32.mrf.mxu0
        %v764 = vadd.f32 %v582, %v763
        %765 = vdwg.mxu0
        %766 = vmatpush.msra.mxu0 %v574
        %767 = vmatpush.msra.mxu0 %v566
        %768 = vmatpush.msra.mxu0 %v558
        %769 = vmatpush.msra.mxu0 %v550
        %770 = vmatpush.msra.mxu0 %v542
        %771 = vmatpush.msra.mxu0 %v534
        %772 = vmatpush.msra.mxu0 %v526
        %773 = vmatpush.msra.mxu0 %v518
        %774 = vmatpush.msra.mxu0 %v510
        %775 = vmatpush.msra.mxu0 %v502
        %776 = vmatpush.msra.mxu0 %v494
        %777 = vmatpush.msra.mxu0 %v486
        %778 = vmatpush.msra.mxu0 %v478
        %779 = vmatpush.msra.mxu0 %v470
        %780 = vmatpush.msra.mxu0 %v462
        %781 = vmatpush.msra.mxu0 %v454
        %782 = vmatmul.f32.gmra.mxu0 %v321
        %v783 = vpop.f32.mrf.mxu0
        %v784 = vadd.f32 %v764, %v783
        %785 = vdwg.mxu0
        %786 = vmatpush.msra.mxu0 %v447
        %787 = vmatpush.msra.mxu0 %v439
        %788 = vmatpush.msra.mxu0 %v431
        %789 = vmatpush.msra.mxu0 %v423
        %790 = vmatpush.msra.mxu0 %v415
        %791 = vmatpush.msra.mxu0 %v407
        %792 = vmatpush.msra.mxu0 %v399
        %793 = vmatpush.msra.mxu0 %v391
        %794 = vmatpush.msra.mxu0 %v383
        %795 = vmatpush.msra.mxu0 %v375
        %796 = vmatpush.msra.mxu0 %v367
        %797 = vmatpush.msra.mxu0 %v359
        %798 = vmatpush.msra.mxu0 %v351
        %799 = vmatpush.msra.mxu0 %v343
        %800 = vmatpush.msra.mxu0 %v335
        %801 = vmatpush.msra.mxu0 %v327
        %802 = vmatmul.f32.gmra.mxu0 %v320
        %v803 = vpop.f32.mrf.mxu0
        %v804 = vadd.f32 %v583, %v803
        %805 = vdwg.mxu0
        %806 = vmatpush.msra.mxu0 %v575
        %807 = vmatpush.msra.mxu0 %v567
        %808 = vmatpush.msra.mxu0 %v559
        %809 = vmatpush.msra.mxu0 %v551
        %810 = vmatpush.msra.mxu0 %v543
        %811 = vmatpush.msra.mxu0 %v535
        %812 = vmatpush.msra.mxu0 %v527
        %813 = vmatpush.msra.mxu0 %v519
        %814 = vmatpush.msra.mxu0 %v511
        %815 = vmatpush.msra.mxu0 %v503
        %816 = vmatpush.msra.mxu0 %v495
        %817 = vmatpush.msra.mxu0 %v487
        %818 = vmatpush.msra.mxu0 %v479
        %819 = vmatpush.msra.mxu0 %v471
        %820 = vmatpush.msra.mxu0 %v463
        %821 = vmatpush.msra.mxu0 %v455
        %822 = vmatmul.f32.gmra.mxu0 %v321
        %v823 = vpop.f32.mrf.mxu0
        %v824 = vadd.f32 %v804, %v823
        %825 = vdwg.mxu0
        %826 = vmatpush.msra.mxu0 %v448
        %827 = vmatpush.msra.mxu0 %v440
        %828 = vmatpush.msra.mxu0 %v432
        %829 = vmatpush.msra.mxu0 %v424
        %830 = vmatpush.msra.mxu0 %v416
        %831 = vmatpush.msra.mxu0 %v408
        %832 = vmatpush.msra.mxu0 %v400
        %833 = vmatpush.msra.mxu0 %v392
        %834 = vmatpush.msra.mxu0 %v384
        %835 = vmatpush.msra.mxu0 %v376
        %836 = vmatpush.msra.mxu0 %v368
        %837 = vmatpush.msra.mxu0 %v360
        %838 = vmatpush.msra.mxu0 %v352
        %839 = vmatpush.msra.mxu0 %v344
        %840 = vmatpush.msra.mxu0 %v336
        %841 = vmatpush.msra.mxu0 %v328
        %842 = vmatmul.f32.gmra.mxu0 %v320
        %v843 = vpop.f32.mrf.mxu0
        %v844 = vadd.f32 %v584, %v843
        %845 = vdwg.mxu0
        %846 = vmatpush.msra.mxu0 %v576
        %847 = vmatpush.msra.mxu0 %v568
        %848 = vmatpush.msra.mxu0 %v560
        %849 = vmatpush.msra.mxu0 %v552
        %850 = vmatpush.msra.mxu0 %v544
        %851 = vmatpush.msra.mxu0 %v536
        %852 = vmatpush.msra.mxu0 %v528
        %853 = vmatpush.msra.mxu0 %v520
        %854 = vmatpush.msra.mxu0 %v512
        %855 = vmatpush.msra.mxu0 %v504
        %856 = vmatpush.msra.mxu0 %v496
        %857 = vmatpush.msra.mxu0 %v488
        %858 = vmatpush.msra.mxu0 %v480
        %859 = vmatpush.msra.mxu0 %v472
        %860 = vmatpush.msra.mxu0 %v464
        %861 = vmatpush.msra.mxu0 %v456
        %862 = vmatmul.f32.gmra.mxu0 %v321
        %v863 = vpop.f32.mrf.mxu0
        %v864 = vadd.f32 %v844, %v863
        %865 = vdwg.mxu0
        %866 = vmatpush.msra.mxu0 %v449
        %867 = vmatpush.msra.mxu0 %v441
        %868 = vmatpush.msra.mxu0 %v433
        %869 = vmatpush.msra.mxu0 %v425
        %870 = vmatpush.msra.mxu0 %v417
        %871 = vmatpush.msra.mxu0 %v409
        %872 = vmatpush.msra.mxu0 %v401
        %873 = vmatpush.msra.mxu0 %v393
        %874 = vmatpush.msra.mxu0 %v385
        %875 = vmatpush.msra.mxu0 %v377
        %876 = vmatpush.msra.mxu0 %v369
        %877 = vmatpush.msra.mxu0 %v361
        %878 = vmatpush.msra.mxu0 %v353
        %879 = vmatpush.msra.mxu0 %v345
        %880 = vmatpush.msra.mxu0 %v337
        %881 = vmatpush.msra.mxu0 %v329
        %882 = vmatmul.f32.gmra.mxu0 %v320
        %v883 = vpop.f32.mrf.mxu0
        %v884 = vadd.f32 %v585, %v883
        %885 = vdwg.mxu0
        %886 = vmatpush.msra.mxu0 %v577
        %887 = vmatpush.msra.mxu0 %v569
        %888 = vmatpush.msra.mxu0 %v561
        %889 = vmatpush.msra.mxu0 %v553
        %890 = vmatpush.msra.mxu0 %v545
        %891 = vmatpush.msra.mxu0 %v537
        %892 = vmatpush.msra.mxu0 %v529
        %893 = vmatpush.msra.mxu0 %v521
        %894 = vmatpush.msra.mxu0 %v513
        %895 = vmatpush.msra.mxu0 %v505
        %896 = vmatpush.msra.mxu0 %v497
        %897 = vmatpush.msra.mxu0 %v489
        %898 = vmatpush.msra.mxu0 %v481
        %899 = vmatpush.msra.mxu0 %v473
        %900 = vmatpush.msra.mxu0 %v465
        %901 = vmatpush.msra.mxu0 %v457
        %902 = vmatmul.f32.gmra.mxu0 %v321
        %v903 = vpop.f32.mrf.mxu0
        %v904 = vadd.f32 %v884, %v903
        %905 = vdwg.mxu0
        %906 = vst [vmem:[%s249] sm:$0xff] %v624
        %907 = vst [vmem:[%s249 + $0x8] sm:$0xff] %v664
        %908 = vst [vmem:[%s249 + $0x10] sm:$0xff] %v704
        %909 = vst [vmem:[%s249 + $0x18] sm:$0xff] %v744
        %910 = vst [vmem:[%s249 + $0x20] sm:$0xff] %v784
        %911 = vst [vmem:[%s249 + $0x28] sm:$0xff] %v824
        %912 = vst [vmem:[%s249 + $0x30] sm:$0xff] %v864
        %913 = vst [vmem:[%s249 + $0x38] sm:$0xff] %v904
        %s914 = sand.u32 %s139, 1
        %s915 = scalar_lea.sflag [#allocation4], %s914
        %s916 = sand.u32 %s139, 1
        %s917 = smul.addr %s916, 64
        %s918 = scalar_lea.vmem [#allocation7], %s917
        // Predicated region
        $region49: #{tpu_custom_call.1} parent=39 // pred_check
          %p919 = pneg %p149
        $region50: #{tpu_custom_call.1} parent=39 // pred_check_branch
          %921 = sbr.rel (%p919) target = $region52
        $region51: #{tpu_custom_call.1} parent=39 // pred_region
          %923 = vsyncadd %s915, 0
          %s924 = smul.addr %s21, 8
          %s925 = smul.addr %s924, 8
          %s926 = scalar_lea.hbm %s5, %s925
          %s928 = sshll.u32 %s918, 4
          %s929 = int_to_ptr.vmem [resolvable:$true] %s928
          %s930 = sshll.u32 %s926, 4
          %s931 = int_to_ptr.hbm [resolvable:$true] %s930
          %933 = dma.vmem_to_hbm [thread:$0]  %s929, 1024, %s931, %s915
        $region52: #{tpu_custom_call.1} parent=39 // pred_fallthru
          _
      $region40: #{tpu_custom_call.1} parent=5 // pred_fallthru
        _
      %p934 = scmp.le.s32.totalorder 2, %s16
      // Predicated region
      $region53: #{tpu_custom_call.1} parent=5 // pred_check
        %p935 = pneg %p934
      $region54: #{tpu_custom_call.1} parent=5 // pred_check_branch
        %937 = sbr.rel (%p935) target = $region56
      $region55: #{tpu_custom_call.1} parent=5 // pred_region
        %s938 = ssub.s32 %s16, 2
        // Predicated region
        $region57: #{tpu_custom_call.1} parent=55 // pred_check
          %p939 = pneg %p155
        $region58: #{tpu_custom_call.1} parent=55 // pred_check_branch
          %941 = sbr.rel (%p939) target = $region60
        $region59: #{tpu_custom_call.1} parent=55 // pred_region
          %s942 = sand.u32 %s140, 1
          %s943 = scalar_lea.sflag [#allocation4], %s942
          %s944 = sand.u32 %s140, 1
          %s945 = smul.addr %s944, 64
          %s946 = scalar_lea.vmem [#allocation7], %s945
          %948 = dma.done %s943, 1024
        $region60: #{tpu_custom_call.1} parent=55 // pred_fallthru
          _
      $region56: #{tpu_custom_call.1} parent=5 // pred_fallthru
        _
    $region6: #{tpu_custom_call.1} parent=1 // loop_footer
      %s20 = sadd.s32 1, %s16
    $region7: #{tpu_custom_call.1} parent=1 // loop_footer_branch
      %15 = sbr.rel target = $region3
    $region8: #{tpu_custom_call.1} parent=1 // loop_exit
      _
    %949 = vsyncpa [#allocation3], 1
    %s950 = scalar_lea.sflag [#allocation3], 1
    %951 = vsyncpa %s950, 1
    %952 = vsyncpa [#allocation6], 1
    %953 = vsyncpa [#allocation4], 1
    %s954 = scalar_lea.sflag [#allocation4], 1
    %955 = vsyncpa %s954, 1

</llo_original>
